<compile_context>
chip_gen: v6e
topology: v6e:2x2x1
jax: 0.10.0
libtpu: 0.0.40
codegen_flags: <defaults>
</compile_context>

<pallas_src>
import functools

import jax
import jax.numpy as jnp
from jax import lax
from jax.experimental import pallas as pl
from jax.experimental.pallas import tpu as pltpu


def _focal_kernel(x_ref, y_ref, out_ref, *, gamma, t_hw, steps_per_split,
                  hw_valid, padded, compute_dtype):
    """One (batch, split, pixel-tile) grid step: accumulate the tile's focal sum."""
    @pl.when(pl.program_id(2) == 0)
    def _init():
        out_ref[...] = jnp.zeros_like(out_ref)

    x = x_ref[0]                                     # (C, T) logits, input dtype
    if x.dtype != compute_dtype:
        x = x.astype(compute_dtype)
    g = y_ref[0]                                     # (1, T) int32 labels

    # ---- channel-axis (sublane) log-sum-exp: single big (C,T) exp ----
    xm = jnp.max(x, axis=0, keepdims=True)           # (1, T)
    xs = x - xm                                      # (C, T) compute dtype
    e = jnp.exp(xs)                                  # (C, T) <- only (C,T) transcendental
    se = jnp.sum(e, axis=0, keepdims=True, dtype=jnp.float32)   # (1, T) f32 accum

    # ---- shifted logit at the label channel: one select + one sublane reduce ----
    cidx = lax.broadcasted_iota(jnp.int32, x.shape, 0)
    xs_y = jnp.sum(jnp.where(cidx == g, xs, 0.0), axis=0,
                   keepdims=True, dtype=jnp.float32)             # (1, T) f32

    # ---- focal loss (alpha = 1), all on (1,T) rows ----
    ce = jnp.log(se) - xs_y                          # per-pixel cross-entropy
    pt = jnp.exp(-ce)                                # tiny (1,T) EUP exp; no divide
    d = 1.0 - pt
    if gamma == 2.0:
        mod = d * d                                  # avoid pow -> exp(log(x)*2)
    else:
        mod = d ** gamma
    focal = mod * ce                                 # (1, T)

    if padded:
        # mask pixels beyond the true H*W (padding added by the wrapper)
        blk = pl.program_id(1) * steps_per_split + pl.program_id(2)
        lane = lax.broadcasted_iota(jnp.int32, focal.shape, 1)
        gpix = blk * t_hw + lane
        focal = jnp.where(gpix < hw_valid, focal, 0.0)

    # scalar accumulate into the lane-dense resident output block
    out_ref[...] += jnp.sum(focal)


def semantic_focal_loss(x, y, *, gamma=2.0, gain=1.0, tile_target=4096,
                        compute_in_bf16=None, hw_split=None,
                        vmem_budget_bytes=20 * 1024 * 1024,
                        vmem_limit_bytes=48 * 1024 * 1024):
    """Forward of SemanticFocalLoss (alpha=1, weight=None).

    x: [N, C, H, W] logits (pass bf16 on v6e/v7x to halve HBM traffic and enable
       bf16 VPU/EUP; on v5e pass bf16 but set compute_in_bf16=False).
    y: [N, H, W] integer class labels.
    Returns: scalar loss = gain * mean_{N,H,W}[(1 - p_t)^gamma * CE].
    """
    N, C, H, W = x.shape
    HW = H * W

    if compute_in_bf16 is None:
        compute_in_bf16 = (x.dtype == jnp.bfloat16)
    compute_dtype = jnp.bfloat16 if compute_in_bf16 else jnp.float32

    # ---- tile size from a VMEM budget (double-buffered inputs + ~3 live (C,T) temps)
    in_bytes = jnp.dtype(x.dtype).itemsize
    c_bytes = jnp.dtype(compute_dtype).itemsize
    per_px = C * (2 * in_bytes + 3 * c_bytes) + 2 * 4 + 32
    t_hw = (vmem_budget_bytes // per_px) // 128 * 128
    t_hw = int(max(128, min(tile_target, t_hw)))
    hw_128 = -(-HW // 128) * 128
    t_hw = min(t_hw, hw_128)                        # never larger than padded HW

    # ---- optional HW-parallel split (second "parallel" grid axis for v7x dual-TC)
    base_steps = -(-HW // t_hw)
    if hw_split is None:
        hw_split = 2 if (N == 1 and base_steps >= 2) else 1
    S = max(1, int(hw_split))
    steps = -(-base_steps // S) * S                 # total tiles, multiple of S
    K = steps // S                                  # tiles per split (reduction axis)
    padded_HW = steps * t_hw
    pad = padded_HW - HW

    xs_arr = x.reshape(N, C, HW)                    # keep native dtype in HBM
    ys_arr = y.reshape(N, 1, HW).astype(jnp.int32)
    if pad:
        xs_arr = jnp.pad(xs_arr, ((0, 0), (0, 0), (0, pad)))
        ys_arr = jnp.pad(ys_arr, ((0, 0), (0, 0), (0, pad)))

    kernel = functools.partial(
        _focal_kernel, gamma=float(gamma), t_hw=t_hw, steps_per_split=K,
        hw_valid=HW, padded=bool(pad), compute_dtype=compute_dtype)

    per_part = pl.pallas_call(
        kernel,
        out_shape=jax.ShapeDtypeStruct((N, S, 8, 128), jnp.float32),
        grid_spec=pltpu.PrefetchScalarGridSpec(
            num_scalar_prefetch=0,
            grid=(N, S, K),
            in_specs=[
                pl.BlockSpec((1, C, t_hw), lambda n, s, k: (n, 0, s * K + k)),
                pl.BlockSpec((1, 1, t_hw), lambda n, s, k: (n, 0, s * K + k)),
            ],
            # output index_map ignores the reduction axis -> accumulator-resident
            out_specs=pl.BlockSpec((1, 1, 8, 128), lambda n, s, k: (n, s, 0, 0)),
        ),
        compiler_params=pltpu.CompilerParams(
            dimension_semantics=("parallel", "parallel", "arbitrary"),
            # <= 48 MiB is safe on v7x (64 MiB physical); may be raised to 64 MiB
            # on v5e/v6e (128 MiB physical) if large C needs deeper buffering.
            vmem_limit_bytes=vmem_limit_bytes,
        ),
    )(xs_arr, ys_arr)

    total = jnp.sum(per_part[:, :, 0, 0])           # per-(batch,split) sums -> global
    return gain * total / (N * HW)                   # loss.mean()


def _ref_semantic_focal_loss(x, y, *, gamma=2.0, gain=1.0):
    """Pure-JAX reference replicating the torch forward (alpha=1, weight=None)."""
    N, C, H, W = x.shape
    logp = jax.nn.log_softmax(x.astype(jnp.float32), axis=1)
    onehot = jax.nn.one_hot(y, C, axis=1, dtype=jnp.float32)
    ce = -jnp.sum(onehot * logp, axis=1)             # (N, H, W)
    pt = jnp.exp(-ce)
    loss = (1.0 - pt) ** gamma * ce
    return gain * jnp.mean(loss)


if __name__ == "__main__":
    key = jax.random.PRNGKey(0)
    N, C, H, W = 2, 4, 16, 16
    k1, k2 = jax.random.split(key, 2)
    x = jax.random.normal(k1, (N, C, H, W), jnp.float32)       # logits
    y = jax.random.randint(k2, (N, H, W), 0, C, jnp.int32)     # labels

    loss = semantic_focal_loss(x, y)
    jax.block_until_ready(loss)

    ref = _ref_semantic_focal_loss(x, y)
    assert jnp.allclose(loss, ref, atol=1e-5, rtol=1e-5), (loss, ref)
    print("KERNEL_OK")
</pallas_src>

<mosaic_0001>
module attributes {stable_mosaic.version = 11 : i64} {
  func.func @_focal_kernel(%arg0: i32, %arg1: i32, %arg2: i32, %arg3: memref<1x4x256xf32, #tpu.memory_space<vmem>>, %arg4: memref<1x1x256xi32, #tpu.memory_space<vmem>>, %arg5: memref<1x1x8x128xf32, #tpu.memory_space<vmem>>) attributes {dimension_semantics = [#tpu.dimension_semantics<parallel>, #tpu.dimension_semantics<parallel>, #tpu.dimension_semantics<arbitrary>], iteration_bounds = array<i64: 2, 1, 1>, scalar_prefetch = 0 : i64, scratch_operands = 0 : i64, tpu.core_type = #tpu.core_type<tc>, window_params = [{transform_indices = @transform_0, window_bounds = array<i64: 1, 4, 256>}, {transform_indices = @transform_1, window_bounds = array<i64: 1, 1, 256>}, {transform_indices = @transform_2, window_bounds = array<i64: 1, 1, 8, 128>}]} {
    %c0_i32 = arith.constant 0 : i32
    %0 = arith.cmpi eq, %arg2, %c0_i32 : i32
    %1 = arith.extui %0 : i1 to i32
    %c0_i32_0 = arith.constant 0 : i32
    %2 = arith.cmpi ne, %1, %c0_i32_0 : i32
    scf.if %2 {
      %cst_20 = arith.constant 0.000000e+00 : f32
      %38 = vector.broadcast %cst_20 : f32 to vector<1x1x8x128xf32>
      %c0_21 = arith.constant 0 : index
      %c0_22 = arith.constant 0 : index
      %c0_23 = arith.constant 0 : index
      %c0_24 = arith.constant 0 : index
      %39 = vector.load %arg5[%c0_21, %c0_22, %c0_23, %c0_24] : memref<1x1x8x128xf32, #tpu.memory_space<vmem>>, vector<1x1x8x128xf32>
      tpu.vector_store %arg5[%c0_21, %c0_22, %c0_23, %c0_24], %38 {strides = array<i32>} : memref<1x1x8x128xf32, #tpu.memory_space<vmem>>, vector<1x1x8x128xf32>,
    } else {
    }
    %c0 = arith.constant 0 : index
    %c0_1 = arith.constant 0 : index
    %c0_2 = arith.constant 0 : index
    %3 = vector.load %arg3[%c0, %c0_1, %c0_2] : memref<1x4x256xf32, #tpu.memory_space<vmem>>, vector<1x4x256xf32>
    %4 = vector.shape_cast %3 : vector<1x4x256xf32> to vector<4x256xf32>
    %c0_3 = arith.constant 0 : index
    %c0_4 = arith.constant 0 : index
    %c0_5 = arith.constant 0 : index
    %5 = vector.load %arg4[%c0_3, %c0_4, %c0_5] : memref<1x1x256xi32, #tpu.memory_space<vmem>>, vector<1x1x256xi32>
    %6 = vector.shape_cast %5 : vector<1x1x256xi32> to vector<1x256xi32>
    %cst = arith.constant dense<0xFF800000> : vector<256xf32>
    %7 = vector.multi_reduction <maximumf>, %4, %cst [0] : vector<4x256xf32> to vector<256xf32>
    %8 = vector.shape_cast %7 : vector<256xf32> to vector<1x256xf32>
    %9 = vector.broadcast %8 : vector<1x256xf32> to vector<4x256xf32>
    %10 = arith.subf %4, %9 : vector<4x256xf32>
    %11 = math.exp %10 : vector<4x256xf32>
    %cst_6 = arith.constant dense<0.000000e+00> : vector<256xf32>
    %12 = vector.multi_reduction <add>, %11, %cst_6 [0] : vector<4x256xf32> to vector<256xf32>
    %13 = vector.shape_cast %12 : vector<256xf32> to vector<1x256xf32>
    %14 = tpu.iota {dimensions = array<i32: 0>} : vector<4x256xi32>
    %15 = vector.broadcast %6 : vector<1x256xi32> to vector<4x256xi32>
    %16 = arith.cmpi eq, %14, %15 : vector<4x256xi32>
    %cst_7 = arith.constant 0.000000e+00 : f32
    %17 = vector.broadcast %cst_7 : f32 to vector<4x256xf32>
    %18 = arith.select %16, %10, %17 : vector<4x256xi1>, vector<4x256xf32>
    %cst_8 = arith.constant dense<0.000000e+00> : vector<256xf32>
    %19 = vector.multi_reduction <add>, %18, %cst_8 [0] : vector<4x256xf32> to vector<256xf32>
    %20 = vector.shape_cast %19 : vector<256xf32> to vector<1x256xf32>
    %21 = math.log %13 : vector<1x256xf32>
    %22 = arith.subf %21, %20 : vector<1x256xf32>
    %cst_9 = arith.constant 0.000000e+00 : f32
    %23 = vector.broadcast %cst_9 : f32 to vector<1x256xf32>
    %24 = arith.subf %23, %22 : vector<1x256xf32>
    %25 = math.exp %24 : vector<1x256xf32>
    %cst_10 = arith.constant 1.000000e+00 : f32
    %26 = vector.broadcast %cst_10 : f32 to vector<1x256xf32>
    %27 = arith.subf %26, %25 : vector<1x256xf32>
    %28 = arith.mulf %27, %27 : vector<1x256xf32>
    %29 = arith.mulf %28, %22 : vector<1x256xf32>
    %c0_11 = arith.constant 0 : index
    %c0_12 = arith.constant 0 : index
    %c0_13 = arith.constant 0 : index
    %c0_14 = arith.constant 0 : index
    %30 = vector.load %arg5[%c0_11, %c0_12, %c0_13, %c0_14] : memref<1x1x8x128xf32, #tpu.memory_space<vmem>>, vector<1x1x8x128xf32>
    %31 = vector.shape_cast %29 : vector<1x256xf32> to vector<1x1x256xf32>
    %cst_15 = arith.constant dense<0.000000e+00> : vector<1xf32>
    %32 = vector.multi_reduction <add>, %31, %cst_15 [1, 2] : vector<1x1x256xf32> to vector<1xf32>
    %33 = vector.shape_cast %32 : vector<1xf32> to vector<1x1x1xf32>
    %34 = vector.extract %33[0, 0, 0] : f32 from vector<1x1x1xf32>
    %35 = vector.broadcast %34 : f32 to vector<1x1x8x128xf32>
    %36 = arith.addf %30, %35 : vector<1x1x8x128xf32>
    %c0_16 = arith.constant 0 : index
    %c0_17 = arith.constant 0 : index
    %c0_18 = arith.constant 0 : index
    %c0_19 = arith.constant 0 : index
    %37 = vector.load %arg5[%c0_16, %c0_17, %c0_18, %c0_19] : memref<1x1x8x128xf32, #tpu.memory_space<vmem>>, vector<1x1x8x128xf32>
    tpu.vector_store %arg5[%c0_16, %c0_17, %c0_18, %c0_19], %36 {strides = array<i32>} : memref<1x1x8x128xf32, #tpu.memory_space<vmem>>, vector<1x1x8x128xf32>,
    return
  }
  func.func @transform_0(%arg0: i32, %arg1: i32, %arg2: i32) -> (i32, i32, i32) {
    %c1_i32 = arith.constant 1 : i32
    %0 = arith.muli %arg1, %c1_i32 : i32
    %1 = arith.addi %0, %arg2 : i32
    %c0_i32 = arith.constant 0 : i32
    %c0_i32_0 = arith.constant 0 : i32
    return %arg0, %c0_i32, %1 : i32, i32, i32
  }
  func.func @transform_1(%arg0: i32, %arg1: i32, %arg2: i32) -> (i32, i32, i32) {
    %c1_i32 = arith.constant 1 : i32
    %0 = arith.muli %arg1, %c1_i32 : i32
    %1 = arith.addi %0, %arg2 : i32
    %c0_i32 = arith.constant 0 : i32
    %c0_i32_0 = arith.constant 0 : i32
    return %arg0, %c0_i32, %1 : i32, i32, i32
  }
  func.func @transform_2(%arg0: i32, %arg1: i32, %arg2: i32) -> (i32, i32, i32, i32) {
    %c0_i32 = arith.constant 0 : i32
    %c0_i32_0 = arith.constant 0 : i32
    %c0_i32_1 = arith.constant 0 : i32
    return %arg0, %arg1, %c0_i32, %c0_i32_0 : i32, i32, i32, i32
  }
}

</mosaic_0001>

<llo_original>
// kernel: tpu_custom_call.1
$region0: #{tpu_custom_call.1}
  #allocation0 [shape = 'u32[]', space=smem, size = 0x4, offset = 0x4, fixed_abs, tag = 'smem constant byte address 0x4 - core index']
  #allocation1 [shape = 'u32[144,128]{1,0:T(1,128)}', space=vmem, size = 0x12000, scoped, tag = 'internal scratch']
  %s0 = inlined_call_operand.hbm [shape: f32[2,4,256], index: 0, kind: input, shape index: {}]
  %s1 = inlined_call_operand.hbm [shape: s32[2,1,256], index: 1, kind: input, shape index: {}]
  %s2 = inlined_call_operand.hbm [shape: f32[2,1,8,128], index: 2, kind: output, shape index: {}]
  %s3 = sld [smem:[#allocation0]]
  $region53: #{tpu_custom_call.1} parent=0
    _
  %s5 = ssub.s32 1, %s3
  %s6 = scalar_select 0, %s5, %s3
  $region1: #{tpu_custom_call.1} parent=0
    #allocation2 [shape = 'u8[8192]{0}', space=vmem, size = 0x2000, scoped, tag = 'input window, operand 0']
    #allocation3 [shape = 's32[2]{0}', space=sflag, size = 0x8, scoped, tag = 'scoped memory for tpu_custom_call.1']
    #allocation4 [shape = 's32[2]{0}', space=sflag, size = 0x8, scoped, tag = 'scoped memory for tpu_custom_call.1']
    #allocation5 [shape = 'u8[2048]{0}', space=vmem, size = 0x800, scoped, tag = 'input window, operand 1']
    #allocation6 [shape = 's32[2]{0}', space=sflag, size = 0x8, scoped, tag = 'scoped memory for tpu_custom_call.1']
    #allocation7 [shape = 'u8[8192]{0}', space=vmem, size = 0x2000, scoped, tag = 'output window, operand 0']
    %7 = vsyncpa [#allocation3], 0
    %s8 = scalar_lea.sflag [#allocation3], 1
    %9 = vsyncpa %s8, 0
    %10 = vsyncpa [#allocation6], 0
    %s11 = scalar_lea.sflag [#allocation6], 1
    %12 = vsyncpa %s11, 0
    %13 = vsyncpa [#allocation4], 0
    %s14 = scalar_lea.sflag [#allocation4], 1
    %15 = vsyncpa %s14, 0
    loop: start=0, step=1, limit=4
    $region2: #{tpu_custom_call.1} parent=1 // loop_pre_header
      _
    $region3: #{tpu_custom_call.1} parent=1 // loop_header
      %s17 = sphi 0, %s21
      %p18 = scmp.ge.s32.totalorder %s17, 4
      %s24 = sphi 0, %s43
      %s25 = sphi 0, %s39
      %s26 = sphi 0, %s35
      %s27 = sphi 0, %s24
      %s28 = sphi 0, %s25
      %s29 = sphi 0, %s26
      %s30 = sphi 0, %s27
      %s31 = sphi 0, %s28
      %s32 = sphi 0, %s29
      %s50 = sphi 0, %s52
      %s53 = sphi 0, %s50
      %s54 = sphi 0, %s53
      %s70 = sphi 0, %s54
      %s80 = sphi 0, %s82
      %s83 = sphi 0, %s80
      %s84 = sphi 0, %s83
      %s100 = sphi 0, %s84
      %s108 = sphi 0, %s110
      %s111 = sphi 0, %s108
      %s112 = sphi 0, %s111
      %s128 = sphi 0, %s112
    $region4: #{tpu_custom_call.1} parent=1 // loop_header_branch
      %20 = sbr.rel (%p18) target = $region8
    $region5: #{tpu_custom_call.1} parent=1 // loop_body
      %s22 = ssub.s32 %s17, 1
      %s23 = ssub.s32 %s17, 2
      %s33 = sadd.s32 1, %s26
      %p34 = scmp.ge.s32.totalorder %s33, 1
      %s35 = scalar_select %p34, 0, %s33
      %s36 = sadd.s32 1, %s25
      %s37 = scalar_select %p34, %s36, %s25
      %p38 = scmp.ge.s32.totalorder %s37, 1
      %s39 = scalar_select %p38, 0, %s37
      %s40 = sadd.s32 1, %s24
      %s41 = scalar_select %p38, %s40, %s24
      %p42 = scmp.ge.s32.totalorder %s41, 2
      %s43 = scalar_select %p42, 0, %s41
      %s44 = sadd.s32 %s25, %s26
      %s45 = sadd.s32 %s39, %s35
      %s46 = ssub.s32 %s24, %s43
      %s47 = ssub.s32 %s44, %s45
      %s48 = sor.u32 %s46, %s47
      %p49 = scmp.eq.s32.totalorder %s48, 0
      %s51 = sadd.s32 %s50, 1
      %s52 = scalar_select %p49, %s50, %s51
      %p55 = pneg %p49
      %p56 = scmp.eq.s32.totalorder %s17, 1
      %p57 = por %p55, %p56
      %p58 = scmp.ne.s32.totalorder %s50, %s53
      %p59 = scmp.eq.s32.totalorder %s17, 0
      %p60 = por %p58, %p59
      %p61 = scmp.ne.s32.totalorder %s50, %s53
      %p62 = scmp.eq.s32.totalorder %s22, 1
      %p63 = por %p61, %p62
      %p64 = scmp.ne.s32.totalorder %s53, %s54
      %p65 = scmp.eq.s32.totalorder %s22, 0
      %p66 = por %p64, %p65
      %p67 = scmp.ne.s32.totalorder %s53, %s54
      %p68 = scmp.eq.s32.totalorder %s23, 1
      %p69 = por %p67, %p68
      %p71 = scmp.ne.s32.totalorder %s54, %s70
      %p72 = scmp.eq.s32.totalorder %s23, 0
      %p73 = por %p71, %p72
      %s74 = sadd.s32 %s25, %s26
      %s75 = sadd.s32 %s39, %s35
      %s76 = ssub.s32 %s24, %s43
      %s77 = ssub.s32 %s74, %s75
      %s78 = sor.u32 %s76, %s77
      %p79 = scmp.eq.s32.totalorder %s78, 0
      %s81 = sadd.s32 %s80, 1
      %s82 = scalar_select %p79, %s80, %s81
      %p85 = pneg %p79
      %p86 = scmp.eq.s32.totalorder %s17, 1
      %p87 = por %p85, %p86
      %p88 = scmp.ne.s32.totalorder %s80, %s83
      %p89 = scmp.eq.s32.totalorder %s17, 0
      %p90 = por %p88, %p89
      %p91 = scmp.ne.s32.totalorder %s80, %s83
      %p92 = scmp.eq.s32.totalorder %s22, 1
      %p93 = por %p91, %p92
      %p94 = scmp.ne.s32.totalorder %s83, %s84
      %p95 = scmp.eq.s32.totalorder %s22, 0
      %p96 = por %p94, %p95
      %p97 = scmp.ne.s32.totalorder %s83, %s84
      %p98 = scmp.eq.s32.totalorder %s23, 1
      %p99 = por %p97, %p98
      %p101 = scmp.ne.s32.totalorder %s84, %s100
      %p102 = scmp.eq.s32.totalorder %s23, 0
      %p103 = por %p101, %p102
      %s104 = ssub.s32 %s24, %s43
      %s105 = ssub.s32 %s25, %s39
      %s106 = sor.u32 %s104, %s105
      %p107 = scmp.eq.s32.totalorder %s106, 0
      %s109 = sadd.s32 %s108, 1
      %s110 = scalar_select %p107, %s108, %s109
      %p113 = pneg %p107
      %p114 = scmp.eq.s32.totalorder %s17, 1
      %p115 = por %p113, %p114
      %p116 = scmp.ne.s32.totalorder %s108, %s111
      %p117 = scmp.eq.s32.totalorder %s17, 0
      %p118 = por %p116, %p117
      %p119 = scmp.ne.s32.totalorder %s108, %s111
      %p120 = scmp.eq.s32.totalorder %s22, 1
      %p121 = por %p119, %p120
      %p122 = scmp.ne.s32.totalorder %s111, %s112
      %p123 = scmp.eq.s32.totalorder %s22, 0
      %p124 = por %p122, %p123
      %p125 = scmp.ne.s32.totalorder %s111, %s112
      %p126 = scmp.eq.s32.totalorder %s23, 1
      %p127 = por %p125, %p126
      %p129 = scmp.ne.s32.totalorder %s112, %s128
      %p130 = scmp.eq.s32.totalorder %s23, 0
      %p131 = por %p129, %p130
      %p132 = scmp.le.s32.totalorder 1, %s17
      %p133 = scmp.lt.s32.totalorder %s17, 3
      %p134 = pnand %p132, %p133
      %p135 = pneg %p134
      // Predicated region
      $region9: #{tpu_custom_call.1} parent=5 // pred_check
        _
      $region10: #{tpu_custom_call.1} parent=5 // pred_check_branch
        %137 = sbr.rel (%p134) target = $region12
      $region11: #{tpu_custom_call.1} parent=5 // pred_region
        %s138 = ssub.s32 %s17, 1
      $region12: #{tpu_custom_call.1} parent=5 // pred_fallthru
        _
      %p139 = scmp.lt.s32.totalorder %s17, 2
      // Predicated region
      $region13: #{tpu_custom_call.1} parent=5 // pred_check
        %p140 = pneg %p139
      $region14: #{tpu_custom_call.1} parent=5 // pred_check_branch
        %142 = sbr.rel (%p140) target = $region16
      $region15: #{tpu_custom_call.1} parent=5 // pred_region
        // Predicated region
        $region17: #{tpu_custom_call.1} parent=15 // pred_check
          %p143 = pneg %p60
        $region18: #{tpu_custom_call.1} parent=15 // pred_check_branch
          %145 = sbr.rel (%p143) target = $region20
        $region19: #{tpu_custom_call.1} parent=15 // pred_region
          %s146 = sand.u32 %s50, 1
          %s147 = scalar_lea.sflag [#allocation3], %s146
          %s148 = sand.u32 %s50, 1
          %s149 = smul.addr %s148, 8
          %s150 = scalar_lea.vmem [#allocation2], %s149
          %s151 = sadd.s32 %s25, %s26
          %s152 = smul.u32 2, %s151
          %s154 = ssub.s32 128, 128
          %155 = vsyncadd %s147, %s154
          %s156 = smul.addr %s24, 2
          %s157 = sadd.s32 %s152, %s156
          %s158 = smul.addr %s157, 64
          %s159 = scalar_lea.hbm %s0, %s158
          %s161 = sshll.u32 %s150, 4
          %s162 = int_to_ptr.vmem [resolvable:$true] %s161
          %164 = dma.hbm_to_vmem [thread:$0]  %s159, 128, %s162, %s147
        $region20: #{tpu_custom_call.1} parent=15 // pred_fallthru
          _
        // Predicated region
        $region21: #{tpu_custom_call.1} parent=15 // pred_check
          %p165 = pneg %p90
        $region22: #{tpu_custom_call.1} parent=15 // pred_check_branch
          %167 = sbr.rel (%p165) target = $region24
        $region23: #{tpu_custom_call.1} parent=15 // pred_region
          %s168 = sand.u32 %s80, 1
          %s169 = scalar_lea.sflag [#allocation6], %s168
          %s170 = sand.u32 %s80, 1
          %s171 = smul.addr %s170, 2
          %s172 = scalar_lea.vmem [#allocation5], %s171
          %s173 = sadd.s32 %s25, %s26
          %s174 = smul.u32 2, %s173
          %s176 = ssub.s32 32, 32
          %177 = vsyncadd %s169, %s176
          %s178 = smul.addr %s24, 2
          %s179 = sadd.s32 %s174, %s178
          %s180 = smul.addr %s179, 16
          %s181 = scalar_lea.hbm %s1, %s180
          %s183 = sshll.u32 %s172, 4
          %s184 = int_to_ptr.vmem [resolvable:$true] %s183
          %186 = dma.hbm_to_vmem [thread:$0]  %s181, 32, %s184, %s169
        $region24: #{tpu_custom_call.1} parent=15 // pred_fallthru
          _
      $region16: #{tpu_custom_call.1} parent=5 // pred_fallthru
        _
      %p187 = scmp.le.s32.totalorder 1, %s17
      %p188 = scmp.lt.s32.totalorder %s17, 3
      %p189 = pnand %p187, %p188
      %p190 = pneg %p189
      // Predicated region
      $region25: #{tpu_custom_call.1} parent=5 // pred_check
        _
      $region26: #{tpu_custom_call.1} parent=5 // pred_check_branch
        %192 = sbr.rel (%p189) target = $region28
      $region27: #{tpu_custom_call.1} parent=5 // pred_region
        %s193 = ssub.s32 %s17, 1
        %s194 = sand.u32 %s53, 1
        %s195 = scalar_lea.sflag [#allocation3], %s194
        %s196 = sand.u32 %s53, 1
        %s197 = smul.addr %s196, 8
        %s198 = scalar_lea.vmem [#allocation2], %s197
        // Predicated region
        $region29: #{tpu_custom_call.1} parent=27 // pred_check
          %p199 = pneg %p66
        $region30: #{tpu_custom_call.1} parent=27 // pred_check_branch
          %201 = sbr.rel (%p199) target = $region32
        $region31: #{tpu_custom_call.1} parent=27 // pred_region
          %202 = dma.done %s195, 128
        $region32: #{tpu_custom_call.1} parent=27 // pred_fallthru
          _
        %s203 = sand.u32 %s83, 1
        %s204 = scalar_lea.sflag [#allocation6], %s203
        %s205 = sand.u32 %s83, 1
        %s206 = smul.addr %s205, 2
        %s207 = scalar_lea.vmem [#allocation5], %s206
        // Predicated region
        $region33: #{tpu_custom_call.1} parent=27 // pred_check
          %p208 = pneg %p96
        $region34: #{tpu_custom_call.1} parent=27 // pred_check_branch
          %210 = sbr.rel (%p208) target = $region36
        $region35: #{tpu_custom_call.1} parent=27 // pred_region
          %211 = dma.done %s204, 32
        $region36: #{tpu_custom_call.1} parent=27 // pred_fallthru
          _
        %s212 = sand.u32 %s53, 1
        %s213 = scalar_lea.sflag [#allocation3], %s212
        %s214 = sand.u32 %s53, 1
        %s215 = smul.addr %s214, 8
        %s216 = scalar_lea.vmem [#allocation2], %s215
        %p217 = pneg %p66
        %p218 = pneg %p63
        %s219 = sand.u32 %s83, 1
        %s220 = scalar_lea.sflag [#allocation6], %s219
        %s221 = sand.u32 %s83, 1
        %s222 = smul.addr %s221, 2
        %s223 = scalar_lea.vmem [#allocation5], %s222
        %p224 = pneg %p96
        %p225 = pneg %p93
        %p226 = pneg %p124
        %p227 = pneg %p121
        %s228 = sand.u32 %s111, 1
        %s229 = scalar_lea.sflag [#allocation4], %s228
        %s230 = sand.u32 %s111, 1
        %s231 = smul.addr %s230, 8
        %s232 = scalar_lea.vmem [#allocation7], %s231
        %s233 = sadd.s32 %s28, %s29
        %s234 = smul.u32 2, %s233
        %s235 = sadd.s32 %s28, %s29
        %s236 = smul.u32 2, %s235
        %p237 = scmp.eq.s32.totalorder %s29, 0
        // Predicated region
        $region37: #{tpu_custom_call.1} parent=27 // pred_check
          %p238 = pneg %p237
        $region38: #{tpu_custom_call.1} parent=27 // pred_check_branch
          %240 = sbr.rel (%p238) target = $region40
        $region39: #{tpu_custom_call.1} parent=27 // pred_region
          %241 = vst [vmem:[%s232] sm:$0xff] 0.0
        $region40: #{tpu_custom_call.1} parent=27 // pred_fallthru
          _
        %v242 = vld [vmem:[%s198] sm:$0xff]
        %v243 = vld [vmem:[%s207] sm:$0x3]
        %v245 = vcombine.high %v242, %v242
        %vm247 = vcmask 1043456
        %v248 = vsel %vm247, %v242, -inf
        %v249 = vrot.slane %v248, 4
        %v250 = vmax.f32 %v248, %v249
        %v251 = vrot.slane %v250, 2
        %v252 = vmax.f32 %v250, %v251
        %v253 = vrot.slane %v252, 1
        %v254 = vmax.f32 %v252, %v253
        %v255 = vsel %vm247, %v245, -inf
        %v256 = vrot.slane %v255, 4
        %v257 = vmax.f32 %v255, %v256
        %v258 = vrot.slane %v257, 2
        %v259 = vmax.f32 %v257, %v258
        %v260 = vrot.slane %v259, 1
        %v261 = vmax.f32 %v259, %v260
        %v264 = vcombine.low %v254, %v261
        %v266 = vsub.f32 %v242, %v264
        %v267 = vmul.f32 %v266, 1.442695
        %v268 = vpow.pop %v267
        %v270 = vcombine.high %v268, %v268
        %v272 = vsel %vm247, %v268, 0.0
        %v273 = vrot.slane %v272, 4
        %v274 = vadd.f32 %v272, %v273
        %v275 = vrot.slane %v274, 2
        %v276 = vadd.f32 %v274, %v275
        %v277 = vrot.slane %v276, 1
        %v278 = vadd.f32 %v276, %v277
        %v279 = vsel %vm247, %v270, 0.0
        %v280 = vrot.slane %v279, 4
        %v281 = vadd.f32 %v279, %v280
        %v282 = vrot.slane %v281, 2
        %v283 = vadd.f32 %v281, %v282
        %v284 = vrot.slane %v283, 1
        %v285 = vadd.f32 %v283, %v284
        %v286 = vlaneseq
        %v287 = vshrl.u32 %v286, 7
        %v288 = vlaneseq
        %v289 = vshrl.u32 %v288, 7
        %v290 = vsub.s32 0, %v289
        %v291 = vrot.slane %v243, %v290
        %v292 = vlaneseq
        %v293 = vshrl.u32 %v292, 7
        %v294 = vsub.s32 1, %v293
        %v295 = vrot.slane %v243, %v294
        %vm296 = vcmp.eq.s32.totalorder %v287, %v291
        %vm297 = vcmp.eq.s32.totalorder %v287, %v295
        %v299 = vcombine.high %v266, %v266
        %v301 = vsel %vm296, %v266, 0.0
        %v302 = vsel %vm297, %v299, 0.0
        %v303 = vsel %vm247, %v301, 0.0
        %v304 = vrot.slane %v303, 4
        %v305 = vadd.f32 %v303, %v304
        %v306 = vrot.slane %v305, 2
        %v307 = vadd.f32 %v305, %v306
        %v308 = vrot.slane %v307, 1
        %v309 = vadd.f32 %v307, %v308
        %v310 = vsel %vm247, %v302, 0.0
        %v311 = vrot.slane %v310, 4
        %v312 = vadd.f32 %v310, %v311
        %v313 = vrot.slane %v312, 2
        %v314 = vadd.f32 %v312, %v313
        %v315 = vrot.slane %v314, 1
        %v316 = vadd.f32 %v314, %v315
        %v317 = vlog2.pop %v278
        %v318 = vmul.f32 %v317, 0.6931472
        %v319 = vlog2.pop %v285
        %v320 = vmul.f32 %v319, 0.6931472
        %v321 = vsub.f32 %v318, %v309
        %v322 = vsub.f32 %v320, %v316
        %v323 = vsub.f32 0.0, %v321
        %v324 = vsub.f32 0.0, %v322
        %v325 = vmul.f32 %v323, 1.442695
        %v326 = vpow.pop %v325
        %v327 = vmul.f32 %v324, 1.442695
        %v328 = vpow.pop %v327
        %v329 = vsub.f32 1.0, %v326
        %v330 = vsub.f32 1.0, %v328
        %v331 = vmul.f32 %v329, %v329
        %v332 = vmul.f32 %v330, %v330
        %v333 = vmul.f32 %v331, %v321
        %v334 = vmul.f32 %v332, %v322
        %v335 = vld [vmem:[%s232] sm:$0xff]
        %vm336 = vcmask 1040384
        %v337 = vsel %vm336, %v333, 0.0
        %v338 = vsel %vm336, %v334, 0.0
        %v339 = vadd.f32 %v337, %v338
        %340 = vadd.xlane.f32.xlu0 %v339
        %v341 = vpop.xlane.xlu0 %340
        %v342 = vrot.slane %v341, 4
        %v343 = vadd.f32 %v341, %v342
        %v344 = vrot.slane %v343, 2
        %v345 = vadd.f32 %v343, %v344
        %v346 = vrot.slane %v345, 1
        %v347 = vadd.f32 %v345, %v346
        %s348 = vtos %v347
        %v349 = vstv %s348
        %v350 = vadd.f32 %v335, %v349
        %351 = vst [vmem:[%s232] sm:$0xff] %v350
        %s352 = sand.u32 %s111, 1
        %s353 = scalar_lea.sflag [#allocation4], %s352
        %s354 = sand.u32 %s111, 1
        %s355 = smul.addr %s354, 8
        %s356 = scalar_lea.vmem [#allocation7], %s355
        // Predicated region
        $region41: #{tpu_custom_call.1} parent=27 // pred_check
          %p357 = pneg %p121
        $region42: #{tpu_custom_call.1} parent=27 // pred_check_branch
          %359 = sbr.rel (%p357) target = $region44
        $region43: #{tpu_custom_call.1} parent=27 // pred_region
          %s361 = ssub.s32 128, 128
          %362 = vsyncadd %s353, %s361
          %s363 = sadd.s32 %s28, %s27
          %s364 = smul.addr %s363, 128
          %s365 = scalar_lea.hbm %s2, %s364
          %s367 = sshll.u32 %s356, 4
          %s368 = int_to_ptr.vmem [resolvable:$true] %s367
          %370 = dma.vmem_to_hbm [thread:$0]  %s368, 128, %s365, %s353
        $region44: #{tpu_custom_call.1} parent=27 // pred_fallthru
          _
      $region28: #{tpu_custom_call.1} parent=5 // pred_fallthru
        _
      %p371 = scmp.le.s32.totalorder 2, %s17
      // Predicated region
      $region45: #{tpu_custom_call.1} parent=5 // pred_check
        %p372 = pneg %p371
      $region46: #{tpu_custom_call.1} parent=5 // pred_check_branch
        %374 = sbr.rel (%p372) target = $region48
      $region47: #{tpu_custom_call.1} parent=5 // pred_region
        %s375 = ssub.s32 %s17, 2
        // Predicated region
        $region49: #{tpu_custom_call.1} parent=47 // pred_check
          %p376 = pneg %p127
        $region50: #{tpu_custom_call.1} parent=47 // pred_check_branch
          %378 = sbr.rel (%p376) target = $region52
        $region51: #{tpu_custom_call.1} parent=47 // pred_region
          %s379 = sand.u32 %s112, 1
          %s380 = scalar_lea.sflag [#allocation4], %s379
          %s381 = sand.u32 %s112, 1
          %s382 = smul.addr %s381, 8
          %s383 = scalar_lea.vmem [#allocation7], %s382
          %384 = dma.done %s380, 128
        $region52: #{tpu_custom_call.1} parent=47 // pred_fallthru
          _
      $region48: #{tpu_custom_call.1} parent=5 // pred_fallthru
        _
    $region6: #{tpu_custom_call.1} parent=1 // loop_footer
      %s21 = sadd.s32 1, %s17
    $region7: #{tpu_custom_call.1} parent=1 // loop_footer_branch
      %16 = sbr.rel target = $region3
    $region8: #{tpu_custom_call.1} parent=1 // loop_exit
      _
    %385 = vsyncpa [#allocation3], 1
    %s386 = scalar_lea.sflag [#allocation3], 1
    %387 = vsyncpa %s386, 1
    %388 = vsyncpa [#allocation6], 1
    %s389 = scalar_lea.sflag [#allocation6], 1
    %390 = vsyncpa %s389, 1
    %391 = vsyncpa [#allocation4], 1
    %s392 = scalar_lea.sflag [#allocation4], 1
    %393 = vsyncpa %s392, 1

</llo_original>
